<compile_context>
chip_gen: v5e
topology: v5e:2x2
jax: 0.10.0
libtpu: 0.0.40
codegen_flags: <defaults>
</compile_context>

<pallas_src>
import jax
import jax.numpy as jnp
from jax.experimental import pallas as pl
from jax.experimental.pallas import tpu as pltpu

_BN_EPS = 1e-5
_LANE = 128
_IN_F = 3
_OUT_F = 5


def _affine_kernel(wb_ref, x_ref, o_ref):
    """y[n, :] = sum_k wb[n, k] * x[k, :] + wb[n, IN_F].

    wb_ref: SMEM (5, 4) packed params (wb[n, k] = W_eff[k, n], wb[n, 3] = b_eff[n])
    x_ref : VMEM (3, TB)   lane-dense input block (batch on lanes)
    o_ref : VMEM (5, TB)   lane-dense output block
    """
    xs = [x_ref[k:k + 1, :].astype(jnp.float32) for k in range(_IN_F)]  # (1, TB)
    rows = []
    for n in range(_OUT_F):                 # tiny static unroll: 15 FMAs total
        acc = xs[0] * wb_ref[n, 0]
        for k in range(1, _IN_F):
            acc = acc + xs[k] * wb_ref[n, k]
        rows.append(acc + wb_ref[n, _IN_F])
    # Assemble once and issue a single dense (unmasked) store of the tile.
    o_ref[...] = jnp.concatenate(rows, axis=0).astype(o_ref.dtype)


def prepare_params(params, eps=_BN_EPS):
    """Fold linear1..linear4 + eval-mode BatchNorm1d into one affine map.

    Returns the packed (OUT_F, IN_F + 1) f32 array consumed by the kernel.
    Call ONCE at model-load time (hoisted out of the per-call path).
    """
    f32 = lambda a: jnp.asarray(a, jnp.float32)

    A = f32(params["w1"]).T                                  # (3, 4); torch W is (out, in)
    b = f32(params["b1"])                                    # (4,)

    A = A @ f32(params["w2"]).T                              # (3, 5)
    b = b @ f32(params["w2"]).T + f32(params["b2"])

    scale = f32(params["bn_gamma"]) * jax.lax.rsqrt(f32(params["bn_var"]) + eps)
    A = A * scale
    b = (b - f32(params["bn_mean"])) * scale + f32(params["bn_beta"])

    A = A @ f32(params["w3"]).T                              # (3, 6)
    b = b @ f32(params["w3"]).T + f32(params["b3"])

    A = A @ f32(params["w4"]).T                              # (3, 5)
    b = b @ f32(params["w4"]).T + f32(params["b4"])

    # Pack as wb[n, :3] = W_eff[:, n], wb[n, 3] = b_eff[n]  -> (5, 4)
    return jnp.concatenate([A.T, b[:, None]], axis=1)


def _pick_batch_tile(B):
    """Lane-tile over the batch: 128-multiple, big enough to amortize the
    ~0.35us/step overhead, small enough that mid/large B gives >=2 'parallel'
    grid steps so v7x's second TensorCore is not idle."""
    if B <= _LANE:
        return B                         # single block (block dim == full dim)
    half = -(-((B + 1) // 2) // _LANE) * _LANE
    return min(4096, half)


def bigger_model_forward(x, wb):
    """x: (B, 3) -> (B, 5), matching the torch module's layout."""
    B = x.shape[0]
    TB = _pick_batch_tile(B)
    grid = (pl.cdiv(B, TB),)

    x_t = x.T                            # (3, B): lane-dense (feature, batch)

    y_t = pl.pallas_call(
        _affine_kernel,
        out_shape=jax.ShapeDtypeStruct((_OUT_F, B), x.dtype),
        grid=grid,
        in_specs=[
            pl.BlockSpec(memory_space=pltpu.MemorySpace.SMEM),  # packed params
            pl.BlockSpec((_IN_F, TB), lambda i: (0, i)),
        ],
        out_specs=pl.BlockSpec((_OUT_F, TB), lambda i: (0, i)),
        compiler_params=pltpu.CompilerParams(
            dimension_semantics=("parallel",)),
    )(wb, x_t)

    return y_t.T                         # (B, 5)


if __name__ == "__main__":
    key = jax.random.PRNGKey(0)
    ks = jax.random.split(key, 13)

    B = 8
    x = jax.random.normal(ks[0], (B, 3), dtype=jnp.float32)

    def lin_init(kw, kb, fan_out, fan_in):
        bound = 1.0 / (fan_in ** 0.5)
        w = jax.random.uniform(kw, (fan_out, fan_in), jnp.float32, -bound, bound)
        b = jax.random.uniform(kb, (fan_out,), jnp.float32, -bound, bound)
        return w, b

    w1, b1 = lin_init(ks[1], ks[2], 4, 3)
    w2, b2 = lin_init(ks[3], ks[4], 5, 4)
    w3, b3 = lin_init(ks[5], ks[6], 6, 5)
    w4, b4 = lin_init(ks[7], ks[8], 5, 6)

    # BatchNorm1d(5) affine parameters and running statistics (inference form).
    bn_gamma = jax.random.uniform(ks[9], (5,), jnp.float32, 0.5, 1.5)
    bn_beta = jax.random.normal(ks[10], (5,), jnp.float32) * 0.1
    bn_mean = jax.random.normal(ks[11], (5,), jnp.float32) * 0.1
    bn_var = jax.random.uniform(ks[12], (5,), jnp.float32, 0.5, 1.5)

    params = dict(w1=w1, b1=b1, w2=w2, b2=b2, w3=w3, b3=b3, w4=w4, b4=b4,
                  bn_gamma=bn_gamma, bn_beta=bn_beta,
                  bn_mean=bn_mean, bn_var=bn_var)

    # One-time parameter fold + pack (hoisted out of the per-call jitted path).
    wb = jax.block_until_ready(prepare_params(params))

    fwd = jax.jit(bigger_model_forward)
    y = jax.block_until_ready(fwd(x, wb))

    # Layer-by-layer pure-JAX reference with identical (eval-mode BN) semantics.
    def ref(x):
        h = x @ w1.T + b1
        h = h @ w2.T + b2
        h = (h - bn_mean) * jax.lax.rsqrt(bn_var + _BN_EPS) * bn_gamma + bn_beta
        h = h @ w3.T + b3
        return h @ w4.T + b4

    y_ref = ref(x)
    assert y.shape == (B, 5)
    assert jnp.allclose(y, y_ref, atol=1e-4, rtol=1e-4), (
        "mismatch vs reference: max abs err "
        f"{float(jnp.max(jnp.abs(y - y_ref)))}")

    print("KERNEL_OK")
</pallas_src>

<mosaic_0001>
module attributes {stable_mosaic.version = 11 : i64} {
  func.func @_affine_kernel(%arg0: i32, %arg1: memref<5x4xf32, #tpu.memory_space<smem>>, %arg2: memref<3x8xf32, #tpu.memory_space<vmem>>, %arg3: memref<5x8xf32, #tpu.memory_space<vmem>>) attributes {dimension_semantics = [#tpu.dimension_semantics<parallel>], iteration_bounds = array<i64: 1>, scalar_prefetch = 0 : i64, scratch_operands = 0 : i64, tpu.core_type = #tpu.core_type<tc>, window_params = [{transform_indices = @transform_0, window_bounds = array<i64: 5, 4>}, {transform_indices = @transform_1, window_bounds = array<i64: 3, 8>}, {transform_indices = @transform_2, window_bounds = array<i64: 5, 8>}]} {
    %c0 = arith.constant 0 : index
    %c0_0 = arith.constant 0 : index
    %0 = vector.load %arg2[%c0, %c0_0] : memref<3x8xf32, #tpu.memory_space<vmem>>, vector<1x8xf32>
    %c1 = arith.constant 1 : index
    %c0_1 = arith.constant 0 : index
    %1 = vector.load %arg2[%c1, %c0_1] : memref<3x8xf32, #tpu.memory_space<vmem>>, vector<1x8xf32>
    %c2 = arith.constant 2 : index
    %c0_2 = arith.constant 0 : index
    %2 = vector.load %arg2[%c2, %c0_2] : memref<3x8xf32, #tpu.memory_space<vmem>>, vector<1x8xf32>
    %c0_3 = arith.constant 0 : index
    %c0_4 = arith.constant 0 : index
    %3 = memref.load %arg1[%c0_3, %c0_4] : memref<5x4xf32, #tpu.memory_space<smem>>
    %4 = vector.broadcast %3 : f32 to vector<1x8xf32>
    %5 = arith.mulf %0, %4 : vector<1x8xf32>
    %c0_5 = arith.constant 0 : index
    %c1_6 = arith.constant 1 : index
    %6 = memref.load %arg1[%c0_5, %c1_6] : memref<5x4xf32, #tpu.memory_space<smem>>
    %7 = vector.broadcast %6 : f32 to vector<1x8xf32>
    %8 = arith.mulf %1, %7 : vector<1x8xf32>
    %9 = arith.addf %5, %8 : vector<1x8xf32>
    %c0_7 = arith.constant 0 : index
    %c2_8 = arith.constant 2 : index
    %10 = memref.load %arg1[%c0_7, %c2_8] : memref<5x4xf32, #tpu.memory_space<smem>>
    %11 = vector.broadcast %10 : f32 to vector<1x8xf32>
    %12 = arith.mulf %2, %11 : vector<1x8xf32>
    %13 = arith.addf %9, %12 : vector<1x8xf32>
    %c0_9 = arith.constant 0 : index
    %c3 = arith.constant 3 : index
    %14 = memref.load %arg1[%c0_9, %c3] : memref<5x4xf32, #tpu.memory_space<smem>>
    %15 = vector.broadcast %14 : f32 to vector<1x8xf32>
    %16 = arith.addf %13, %15 : vector<1x8xf32>
    %c1_10 = arith.constant 1 : index
    %c0_11 = arith.constant 0 : index
    %17 = memref.load %arg1[%c1_10, %c0_11] : memref<5x4xf32, #tpu.memory_space<smem>>
    %18 = vector.broadcast %17 : f32 to vector<1x8xf32>
    %19 = arith.mulf %0, %18 : vector<1x8xf32>
    %c1_12 = arith.constant 1 : index
    %c1_13 = arith.constant 1 : index
    %20 = memref.load %arg1[%c1_12, %c1_13] : memref<5x4xf32, #tpu.memory_space<smem>>
    %21 = vector.broadcast %20 : f32 to vector<1x8xf32>
    %22 = arith.mulf %1, %21 : vector<1x8xf32>
    %23 = arith.addf %19, %22 : vector<1x8xf32>
    %c1_14 = arith.constant 1 : index
    %c2_15 = arith.constant 2 : index
    %24 = memref.load %arg1[%c1_14, %c2_15] : memref<5x4xf32, #tpu.memory_space<smem>>
    %25 = vector.broadcast %24 : f32 to vector<1x8xf32>
    %26 = arith.mulf %2, %25 : vector<1x8xf32>
    %27 = arith.addf %23, %26 : vector<1x8xf32>
    %c1_16 = arith.constant 1 : index
    %c3_17 = arith.constant 3 : index
    %28 = memref.load %arg1[%c1_16, %c3_17] : memref<5x4xf32, #tpu.memory_space<smem>>
    %29 = vector.broadcast %28 : f32 to vector<1x8xf32>
    %30 = arith.addf %27, %29 : vector<1x8xf32>
    %c2_18 = arith.constant 2 : index
    %c0_19 = arith.constant 0 : index
    %31 = memref.load %arg1[%c2_18, %c0_19] : memref<5x4xf32, #tpu.memory_space<smem>>
    %32 = vector.broadcast %31 : f32 to vector<1x8xf32>
    %33 = arith.mulf %0, %32 : vector<1x8xf32>
    %c2_20 = arith.constant 2 : index
    %c1_21 = arith.constant 1 : index
    %34 = memref.load %arg1[%c2_20, %c1_21] : memref<5x4xf32, #tpu.memory_space<smem>>
    %35 = vector.broadcast %34 : f32 to vector<1x8xf32>
    %36 = arith.mulf %1, %35 : vector<1x8xf32>
    %37 = arith.addf %33, %36 : vector<1x8xf32>
    %c2_22 = arith.constant 2 : index
    %c2_23 = arith.constant 2 : index
    %38 = memref.load %arg1[%c2_22, %c2_23] : memref<5x4xf32, #tpu.memory_space<smem>>
    %39 = vector.broadcast %38 : f32 to vector<1x8xf32>
    %40 = arith.mulf %2, %39 : vector<1x8xf32>
    %41 = arith.addf %37, %40 : vector<1x8xf32>
    %c2_24 = arith.constant 2 : index
    %c3_25 = arith.constant 3 : index
    %42 = memref.load %arg1[%c2_24, %c3_25] : memref<5x4xf32, #tpu.memory_space<smem>>
    %43 = vector.broadcast %42 : f32 to vector<1x8xf32>
    %44 = arith.addf %41, %43 : vector<1x8xf32>
    %c3_26 = arith.constant 3 : index
    %c0_27 = arith.constant 0 : index
    %45 = memref.load %arg1[%c3_26, %c0_27] : memref<5x4xf32, #tpu.memory_space<smem>>
    %46 = vector.broadcast %45 : f32 to vector<1x8xf32>
    %47 = arith.mulf %0, %46 : vector<1x8xf32>
    %c3_28 = arith.constant 3 : index
    %c1_29 = arith.constant 1 : index
    %48 = memref.load %arg1[%c3_28, %c1_29] : memref<5x4xf32, #tpu.memory_space<smem>>
    %49 = vector.broadcast %48 : f32 to vector<1x8xf32>
    %50 = arith.mulf %1, %49 : vector<1x8xf32>
    %51 = arith.addf %47, %50 : vector<1x8xf32>
    %c3_30 = arith.constant 3 : index
    %c2_31 = arith.constant 2 : index
    %52 = memref.load %arg1[%c3_30, %c2_31] : memref<5x4xf32, #tpu.memory_space<smem>>
    %53 = vector.broadcast %52 : f32 to vector<1x8xf32>
    %54 = arith.mulf %2, %53 : vector<1x8xf32>
    %55 = arith.addf %51, %54 : vector<1x8xf32>
    %c3_32 = arith.constant 3 : index
    %c3_33 = arith.constant 3 : index
    %56 = memref.load %arg1[%c3_32, %c3_33] : memref<5x4xf32, #tpu.memory_space<smem>>
    %57 = vector.broadcast %56 : f32 to vector<1x8xf32>
    %58 = arith.addf %55, %57 : vector<1x8xf32>
    %c4 = arith.constant 4 : index
    %c0_34 = arith.constant 0 : index
    %59 = memref.load %arg1[%c4, %c0_34] : memref<5x4xf32, #tpu.memory_space<smem>>
    %60 = vector.broadcast %59 : f32 to vector<1x8xf32>
    %61 = arith.mulf %0, %60 : vector<1x8xf32>
    %c4_35 = arith.constant 4 : index
    %c1_36 = arith.constant 1 : index
    %62 = memref.load %arg1[%c4_35, %c1_36] : memref<5x4xf32, #tpu.memory_space<smem>>
    %63 = vector.broadcast %62 : f32 to vector<1x8xf32>
    %64 = arith.mulf %1, %63 : vector<1x8xf32>
    %65 = arith.addf %61, %64 : vector<1x8xf32>
    %c4_37 = arith.constant 4 : index
    %c2_38 = arith.constant 2 : index
    %66 = memref.load %arg1[%c4_37, %c2_38] : memref<5x4xf32, #tpu.memory_space<smem>>
    %67 = vector.broadcast %66 : f32 to vector<1x8xf32>
    %68 = arith.mulf %2, %67 : vector<1x8xf32>
    %69 = arith.addf %65, %68 : vector<1x8xf32>
    %c4_39 = arith.constant 4 : index
    %c3_40 = arith.constant 3 : index
    %70 = memref.load %arg1[%c4_39, %c3_40] : memref<5x4xf32, #tpu.memory_space<smem>>
    %71 = vector.broadcast %70 : f32 to vector<1x8xf32>
    %72 = arith.addf %69, %71 : vector<1x8xf32>
    %73 = tpu.concatenate %16, %30, %44, %58, %72 in 0 : vector<1x8xf32>, vector<1x8xf32>, vector<1x8xf32>, vector<1x8xf32>, vector<1x8xf32> -> vector<5x8xf32>
    %c0_41 = arith.constant 0 : index
    %c0_42 = arith.constant 0 : index
    %74 = vector.load %arg3[%c0_41, %c0_42] : memref<5x8xf32, #tpu.memory_space<vmem>>, vector<5x8xf32>
    tpu.vector_store %arg3[%c0_41, %c0_42], %73 {strides = array<i32>} : memref<5x8xf32, #tpu.memory_space<vmem>>, vector<5x8xf32>,
    return
  }
  func.func @transform_0(%arg0: i32) -> (i32, i32) {
    %c0_i32 = arith.constant 0 : i32
    %c0_i32_0 = arith.constant 0 : i32
    %c0_i32_1 = arith.constant 0 : i32
    return %c0_i32, %c0_i32_0 : i32, i32
  }
  func.func @transform_1(%arg0: i32) -> (i32, i32) {
    %c0_i32 = arith.constant 0 : i32
    %c0_i32_0 = arith.constant 0 : i32
    return %c0_i32, %arg0 : i32, i32
  }
  func.func @transform_2(%arg0: i32) -> (i32, i32) {
    %c0_i32 = arith.constant 0 : i32
    %c0_i32_0 = arith.constant 0 : i32
    return %c0_i32, %arg0 : i32, i32
  }
}

</mosaic_0001>

<llo_original>
// kernel: bigger_model_forward.1
$region0: #{bigger_model_forward.1}
  #allocation0 [shape = 'u32[]', space=smem, size = 0x4, offset = 0x4, fixed_abs, tag = 'smem constant byte address 0x4 - core index']
  #allocation1 [shape = 'u32[72,128]{1,0:T(1,128)}', space=vmem, size = 0x9000, scoped, tag = 'internal scratch']
  %s0 = inlined_call_operand.vmem [shape: f32[5,4], index: 0, kind: input, shape index: {}]
  %s1 = inlined_call_operand.vmem [shape: f32[3,8], index: 1, kind: input, shape index: {}]
  %s2 = inlined_call_operand.vmem [shape: f32[5,8], index: 2, kind: output, shape index: {}]
  %s3 = sld [smem:[#allocation0]]
  $region22: #{bigger_model_forward.1} parent=0
    _
  %s5 = ssub.s32 1, %s3
  %s6 = scalar_select 0, %s5, %s3
  $region1: #{bigger_model_forward.1} parent=0
    #allocation2 [shape = 'u8[4096]{0}', space=smem, size = 0x1000, scoped, tag = 'input window, operand 0, single buffered']
    #allocation3 [shape = 's32[1]{0}', space=sflag, size = 0x4, scoped, tag = 'scoped memory for bigger_model_forward.1']
    %7 = vsyncpa [#allocation3], 0
    // Predicated region
    $region2: #{bigger_model_forward.1} parent=1 // pred_check
      _
    $region3: #{bigger_model_forward.1} parent=1 // pred_check_branch
      %9 = sbr.rel (0) target = $region5
    $region4: #{bigger_model_forward.1} parent=1 // pred_region
      %11 = vsyncadd [#allocation3], 0
      %s13 = sshll.u32 %s0, 4
      %s14 = int_to_ptr.vmem [resolvable:$true] %s13
      %16 = dma.vmem_to_smem %s14, 128, [#allocation2], [#allocation3]
    $region5: #{bigger_model_forward.1} parent=1 // pred_fallthru
      _
    // Predicated region
    $region6: #{bigger_model_forward.1} parent=1 // pred_check
      _
    $region7: #{bigger_model_forward.1} parent=1 // pred_check_branch
      %18 = sbr.rel (0) target = $region9
    $region8: #{bigger_model_forward.1} parent=1 // pred_region
      _
    $region9: #{bigger_model_forward.1} parent=1 // pred_fallthru
      _
    // Predicated region
    $region10: #{bigger_model_forward.1} parent=1 // pred_check
      _
    $region11: #{bigger_model_forward.1} parent=1 // pred_check_branch
      %20 = sbr.rel (0) target = $region13
    $region12: #{bigger_model_forward.1} parent=1 // pred_region
      %22 = dma.done [#allocation3], 128
    $region13: #{bigger_model_forward.1} parent=1 // pred_fallthru
      _
    %23 = sfence
    %v24 = vld [vmem:[%s1] sm:$0x1]
    %v25 = vld [vmem:[%s1 + $0x1] sm:$0x1]
    %v26 = vld [vmem:[%s1 + $0x2] sm:$0x1]
    %s27 = sld [smem:[#allocation2]]
    %v28 = vstv %s27
    %v29 = vmul.f32 %v24, %v28
    %s30 = sld [smem:[#allocation2 + $0x1]]
    %v31 = vstv %s30
    %v32 = vmul.f32 %v25, %v31
    %v33 = vadd.f32 %v29, %v32
    %s34 = sld [smem:[#allocation2 + $0x2]]
    %v35 = vstv %s34
    %v36 = vmul.f32 %v26, %v35
    %v37 = vadd.f32 %v33, %v36
    %s38 = sld [smem:[#allocation2 + $0x3]]
    %v39 = vstv %s38
    %v40 = vadd.f32 %v37, %v39
    %s41 = sld [smem:[#allocation2 + $0x80]]
    %v42 = vstv %s41
    %v43 = vmul.f32 %v24, %v42
    %s44 = sld [smem:[#allocation2 + $0x81]]
    %v45 = vstv %s44
    %v46 = vmul.f32 %v25, %v45
    %v47 = vadd.f32 %v43, %v46
    %s48 = sld [smem:[#allocation2 + $0x82]]
    %v49 = vstv %s48
    %v50 = vmul.f32 %v26, %v49
    %v51 = vadd.f32 %v47, %v50
    %s52 = sld [smem:[#allocation2 + $0x83]]
    %v53 = vstv %s52
    %v54 = vadd.f32 %v51, %v53
    %s55 = sld [smem:[#allocation2 + $0x100]]
    %v56 = vstv %s55
    %v57 = vmul.f32 %v24, %v56
    %s58 = sld [smem:[#allocation2 + $0x101]]
    %v59 = vstv %s58
    %v60 = vmul.f32 %v25, %v59
    %v61 = vadd.f32 %v57, %v60
    %s62 = sld [smem:[#allocation2 + $0x102]]
    %v63 = vstv %s62
    %v64 = vmul.f32 %v26, %v63
    %v65 = vadd.f32 %v61, %v64
    %s66 = sld [smem:[#allocation2 + $0x103]]
    %v67 = vstv %s66
    %v68 = vadd.f32 %v65, %v67
    %s69 = sld [smem:[#allocation2 + $0x180]]
    %v70 = vstv %s69
    %v71 = vmul.f32 %v24, %v70
    %s72 = sld [smem:[#allocation2 + $0x181]]
    %v73 = vstv %s72
    %v74 = vmul.f32 %v25, %v73
    %v75 = vadd.f32 %v71, %v74
    %s76 = sld [smem:[#allocation2 + $0x182]]
    %v77 = vstv %s76
    %v78 = vmul.f32 %v26, %v77
    %v79 = vadd.f32 %v75, %v78
    %s80 = sld [smem:[#allocation2 + $0x183]]
    %v81 = vstv %s80
    %v82 = vadd.f32 %v79, %v81
    %s83 = sld [smem:[#allocation2 + $0x200]]
    %v84 = vstv %s83
    %v85 = vmul.f32 %v24, %v84
    %s86 = sld [smem:[#allocation2 + $0x201]]
    %v87 = vstv %s86
    %v88 = vmul.f32 %v25, %v87
    %v89 = vadd.f32 %v85, %v88
    %s90 = sld [smem:[#allocation2 + $0x202]]
    %v91 = vstv %s90
    %v92 = vmul.f32 %v26, %v91
    %v93 = vadd.f32 %v89, %v92
    %s94 = sld [smem:[#allocation2 + $0x203]]
    %v95 = vstv %s94
    %v96 = vadd.f32 %v93, %v95
    %v98 = vrot.slane %v54, 7
    %v101 = vrot.slane %v68, 6
    %v104 = vrot.slane %v82, 5
    %v107 = vrot.slane %v96, 4
    %vm109 = vcmask 1040384
    %v110 = vsel %vm109, %v40, %v98
    %vm111 = vcmask 1041408
    %v112 = vsel %vm111, %v110, %v101
    %vm113 = vcmask 1042432
    %v114 = vsel %vm113, %v112, %v104
    %vm115 = vcmask 1043456
    %v116 = vsel %vm115, %v114, %v107
    %vm117 = vcmask 61440
    %118 = vst.msk [vmem:[%s2] sm:$0x1f] %vm117, %v116
    // Predicated region
    $region14: #{bigger_model_forward.1} parent=1 // pred_check
      _
    $region15: #{bigger_model_forward.1} parent=1 // pred_check_branch
      %120 = sbr.rel (0) target = $region17
    $region16: #{bigger_model_forward.1} parent=1 // pred_region
      _
    $region17: #{bigger_model_forward.1} parent=1 // pred_fallthru
      _
    // Predicated region
    $region18: #{bigger_model_forward.1} parent=1 // pred_check
      _
    $region19: #{bigger_model_forward.1} parent=1 // pred_check_branch
      %122 = sbr.rel (0) target = $region21
    $region20: #{bigger_model_forward.1} parent=1 // pred_region
      _
    $region21: #{bigger_model_forward.1} parent=1 // pred_fallthru
      _
    %123 = vsyncpa [#allocation3], 1

</llo_original>
